<compile_context>
chip_gen: v6e
topology: v6e:2x2x1
jax: 0.10.0
libtpu: 0.0.40
codegen_flags: <defaults>
</compile_context>

<pallas_src>
import jax
import jax.numpy as jnp
from jax.experimental import pallas as pl
from jax.experimental.pallas import tpu as pltpu

HIDDEN = 128  # hidden width of the MLP head: nn.Linear(input_dim, 128)


def _round_up(n, m):
    return (n + m - 1) // m * m


def mlp_head_kernel(x_ref, w1_ref, b1_ref, w2_ref, b2_ref, o_ref, h_acc):
    # Grid: (batch tiles [parallel], D_in tiles [arbitrary reduction]).
    # x_ref: (TB, TK)    w1_ref: (TK, 128)     b1_ref: (1, 128) f32
    # w2_ref: (128, DO)  b2_ref: (1, DO) f32   o_ref: (TB, DO)
    # h_acc:  (TB, 128) f32 scratch, persists across the k axis for one batch tile.
    k = pl.program_id(1)

    @pl.when(k == 0)
    def _():
        h_acc[...] = jnp.zeros_like(h_acc)

    # First matmul on the MXU, accumulated in f32 across D_in tiles.
    h_acc[...] += jnp.dot(x_ref[...], w1_ref[...], preferred_element_type=jnp.float32)

    @pl.when(k == pl.num_programs(1) - 1)
    def _():
        # Bias + ReLU in f32 (VPU); second (tiny) matmul kept fully in f32 so the
        # hidden activation is not re-quantized in the bf16-input path.
        h = jnp.maximum(h_acc[...] + b1_ref[...], 0.0)
        y = jnp.dot(h, w2_ref[...].astype(jnp.float32),
                    preferred_element_type=jnp.float32) + b2_ref[...]
        o_ref[...] = y.astype(o_ref.dtype)


def mlp_head(x, w1, b1, w2, b2, *, tile_b=512, tile_k=None,
             compute_dtype=jnp.bfloat16, out_dtype=None, vmem_budget_bytes=None):
    """y = relu(x @ w1 + b1) @ w2 + b2.

    x:  (B, D_in)      w1: (D_in, 128)  b1: (128,)
    w2: (128, D_out)   b2: (D_out,)     -> (B, D_out) in out_dtype (default x.dtype).

    compute_dtype (default bf16) only narrows the HBM-resident x/w1/w2; the first
    matmul accumulates in f32 and bias/ReLU/second matmul run entirely in f32.
    Pass compute_dtype=jnp.float32 (or None) for a pure-f32 forward pass.
    """
    B, D_in = x.shape
    H = w1.shape[1]
    D_out = w2.shape[1]
    if out_dtype is None:
        out_dtype = x.dtype

    if compute_dtype is not None:
        x = x.astype(compute_dtype)
        w1 = w1.astype(compute_dtype)
        w2 = w2.astype(compute_dtype)
    b1_2d = b1.reshape(1, H).astype(jnp.float32)

    c_item = jnp.dtype(x.dtype).itemsize
    o_item = jnp.dtype(out_dtype).itemsize
    sub = 8 if c_item >= 4 else (16 if c_item == 2 else 32)  # sublane packing multiple

    # --- Output width: pad to a lane-dense multiple of 128 only when it is cheap.
    # For tiny heads (e.g. D_out=8) padding would multiply output HBM writeback by
    # up to 16x on an HBM-bound kernel; masked stores are far cheaper.
    D_out_p = _round_up(D_out, 128)
    if (D_out_p - D_out) * 8 > D_out:
        D_out_p = D_out
    if D_out_p != D_out:
        w2 = jnp.pad(w2, ((0, 0), (0, D_out_p - D_out)))
        b2 = jnp.pad(b2, (0, D_out_p - D_out))
    b2_2d = b2.reshape(1, D_out_p).astype(jnp.float32)

    # --- Generation-aware VMEM budget (v5e/v6e: 128 MiB, v7x: 64 MiB per TC).
    if vmem_budget_bytes is None:
        try:
            vmem_cap = int(pltpu.get_tpu_info().vmem_capacity_bytes)
        except Exception:          # conservative fallback (v7x per-TC capacity)
            vmem_cap = 64 << 20
        vmem_cap = max(vmem_cap, 32 << 20)
        budget = (vmem_cap * 3) // 4
    else:
        budget = int(vmem_budget_bytes)
        vmem_cap = max(budget + (16 << 20), 64 << 20)

    w2_item = jnp.dtype(w2.dtype).itemsize

    def vmem_est(tb_, tk_):
        # BlockSpec double-buffers every operand (conservative for the resident ones).
        est = 2 * tb_ * tk_ * c_item                 # x tile
        est += 2 * tk_ * H * c_item                  # w1 tile
        est += 2 * H * D_out_p * w2_item             # w2 (resident)
        est += 2 * (H + D_out_p) * 4                 # biases (f32)
        est += 2 * tb_ * D_out_p * o_item            # output tile
        est += tb_ * H * 4                           # f32 hidden accumulator scratch
        return est

    # --- Batch tile: sublane multiple, big enough for DMA/MXU efficiency, capped so
    # medium batches still give >=2 "parallel" tiles (shards over v7x's 2 TCs).
    tb = min(_round_up(tile_b, sub), _round_up(B, sub))
    if B >= 512:
        tb = min(tb, _round_up(-(-B // 2), sub))

    # --- D_in tiling: keep the full reduction resident when it fits, otherwise split
    # D_in over an "arbitrary" grid axis so tb stays large (accumulator is tiny).
    if tile_k is None:
        tk = D_in if (D_in <= 1024 or vmem_est(tb, D_in) <= budget) else 512
    else:
        tk = int(tile_k)
    if tk < D_in:
        tk = _round_up(tk, 128)
    if tk >= D_in:
        tk, D_in_p = D_in, D_in
    else:
        D_in_p = _round_up(D_in, tk)
    if D_in_p != D_in:  # zero columns/rows contribute nothing to the matmul
        x = jnp.pad(x, ((0, 0), (0, D_in_p - D_in)))
        w1 = jnp.pad(w1, ((0, D_in_p - D_in), (0, 0)))
    nk = D_in_p // tk

    # Last resort: shrink the batch tile until the working set fits the budget.
    while tb > sub and vmem_est(tb, tk) > budget:
        tb = max(sub, _round_up(tb // 2, sub))

    # --- Batch padding so the grid covers B exactly (padded rows sliced off after).
    B_pad = _round_up(B, tb)
    if B_pad != B:
        x = jnp.pad(x, ((0, B_pad - B), (0, 0)))
    nb = B_pad // tb

    vmem_limit = int(min(max(vmem_est(tb, tk) + (8 << 20), 32 << 20),
                         vmem_cap - (8 << 20)))

    w1_passes = nb if nk > 1 else 1   # split-K streams w1 once per batch tile
    cost = pl.CostEstimate(
        flops=int(2 * B_pad * D_in_p * H + 2 * B_pad * H * D_out_p),
        transcendentals=0,
        bytes_accessed=int(B_pad * D_in_p * c_item
                           + w1_passes * D_in_p * H * c_item
                           + H * D_out_p * w2_item
                           + (H + D_out_p) * 4
                           + B_pad * D_out_p * o_item),
    )

    out = pl.pallas_call(
        mlp_head_kernel,
        out_shape=jax.ShapeDtypeStruct((B_pad, D_out_p), out_dtype),
        grid_spec=pltpu.PrefetchScalarGridSpec(
            num_scalar_prefetch=0,
            grid=(nb, nk),
            in_specs=[
                pl.BlockSpec((tb, tk), lambda i, k: (i, k)),       # x tile
                pl.BlockSpec((tk, H), lambda i, k: (k, 0)),        # w1 (resident if nk==1)
                pl.BlockSpec((1, H), lambda i, k: (0, 0)),         # b1 resident
                pl.BlockSpec((H, D_out_p), lambda i, k: (0, 0)),   # w2 resident
                pl.BlockSpec((1, D_out_p), lambda i, k: (0, 0)),   # b2 resident
            ],
            out_specs=pl.BlockSpec((tb, D_out_p), lambda i, k: (i, 0)),
            scratch_shapes=[pltpu.VMEM((tb, H), jnp.float32)],
        ),
        compiler_params=pltpu.CompilerParams(
            dimension_semantics=("parallel", "arbitrary"),
            vmem_limit_bytes=vmem_limit,
        ),
        cost_estimate=cost,
    )(x, w1, b1_2d, w2, b2_2d)

    return out[:B, :D_out]


def mlp_head_ref(x, w1, b1, w2, b2):
    h = jnp.maximum(x @ w1 + b1, 0.0)
    return h @ w2 + b2


if __name__ == "__main__":
    key = jax.random.PRNGKey(0)
    kx, kw1, kb1, kw2, kb2, kx2, kw1b, kw2b, kb2b = jax.random.split(key, 9)

    # Small shapes consistent with the module: batch=16, input_dim=32, output_dim=8.
    B, D_in, D_out = 16, 32, 8
    x = jax.random.normal(kx, (B, D_in), dtype=jnp.float32)
    w1 = jax.random.normal(kw1, (D_in, HIDDEN), dtype=jnp.float32) / jnp.sqrt(D_in)
    b1 = jax.random.normal(kb1, (HIDDEN,), dtype=jnp.float32) * 0.01
    w2 = jax.random.normal(kw2, (HIDDEN, D_out), dtype=jnp.float32) / jnp.sqrt(HIDDEN)
    b2 = jax.random.normal(kb2, (D_out,), dtype=jnp.float32) * 0.01
    ref = mlp_head_ref(x, w1, b1, w2, b2)

    # Exact f32 path (D_out=8 -> no output padding, masked stores).
    out = jax.block_until_ready(mlp_head(x, w1, b1, w2, b2, compute_dtype=jnp.float32))
    assert out.shape == (B, D_out)
    assert jnp.allclose(out, ref, atol=1e-5, rtol=1e-5), "f32 mismatch vs reference"

    # Default bf16-input path (f32 accumulation): looser tolerance.
    out_bf = jax.block_until_ready(mlp_head(x, w1, b1, w2, b2))
    assert out_bf.shape == (B, D_out) and out_bf.dtype == x.dtype
    assert jnp.allclose(out_bf, ref, atol=1e-1, rtol=1e-1), "bf16 mismatch vs reference"

    # Non-divisible batch + split-D_in reduction + (cheap) padded D_out, still small.
    B2, D_in2, D_out2 = 13, 256, 120
    x2 = jax.random.normal(kx2, (B2, D_in2), dtype=jnp.float32)
    w1b = jax.random.normal(kw1b, (D_in2, HIDDEN), dtype=jnp.float32) / jnp.sqrt(D_in2)
    w2b = jax.random.normal(kw2b, (HIDDEN, D_out2), dtype=jnp.float32) / jnp.sqrt(HIDDEN)
    b2b = jax.random.normal(kb2b, (D_out2,), dtype=jnp.float32) * 0.01
    ref2 = mlp_head_ref(x2, w1b, b1, w2b, b2b)
    out2 = jax.block_until_ready(
        mlp_head(x2, w1b, b1, w2b, b2b, compute_dtype=jnp.float32, tile_k=128))
    assert out2.shape == (B2, D_out2)
    assert jnp.allclose(out2, ref2, atol=1e-4, rtol=1e-4), "mismatch (padded batch / split K)"

    print("KERNEL_OK")
</pallas_src>

<mosaic_0001>
module attributes {stable_mosaic.version = 11 : i64} {
  func.func @mlp_head_kernel(%arg0: i32, %arg1: i32, %arg2: memref<16x32xf32, #tpu.memory_space<vmem>>, %arg3: memref<32x128xf32, #tpu.memory_space<vmem>>, %arg4: memref<1x128xf32, #tpu.memory_space<vmem>>, %arg5: memref<128x8xf32, #tpu.memory_space<vmem>>, %arg6: memref<1x8xf32, #tpu.memory_space<vmem>>, %arg7: memref<16x8xf32, #tpu.memory_space<vmem>>, %arg8: memref<16x128xf32, #tpu.memory_space<vmem>>) attributes {dimension_semantics = [#tpu.dimension_semantics<parallel>, #tpu.dimension_semantics<arbitrary>], iteration_bounds = array<i64: 1, 1>, scalar_prefetch = 0 : i64, scratch_operands = 1 : i64, tpu.core_type = #tpu.core_type<tc>, window_params = [{transform_indices = @transform_0, window_bounds = array<i64: 16, 32>}, {transform_indices = @transform_1, window_bounds = array<i64: 32, 128>}, {pipeline_mode = #tpu.pipeline_mode<synchronous>, transform_indices = @transform_2, window_bounds = array<i64: 1, 128>}, {pipeline_mode = #tpu.pipeline_mode<synchronous>, transform_indices = @transform_3, window_bounds = array<i64: 128, 8>}, {pipeline_mode = #tpu.pipeline_mode<synchronous>, transform_indices = @transform_4, window_bounds = array<i64: 1, 8>}, {transform_indices = @transform_5, window_bounds = array<i64: 16, 8>}]} {
    %c0_i32 = arith.constant 0 : i32
    %0 = arith.cmpi eq, %arg1, %c0_i32 : i32
    %1 = arith.extui %0 : i1 to i32
    %c0_i32_0 = arith.constant 0 : i32
    %2 = arith.cmpi ne, %1, %c0_i32_0 : i32
    scf.if %2 {
      %cst_10 = arith.constant 0.000000e+00 : f32
      %12 = vector.broadcast %cst_10 : f32 to vector<16x128xf32>
      %c0_11 = arith.constant 0 : index
      %c0_12 = arith.constant 0 : index
      %13 = vector.load %arg8[%c0_11, %c0_12] : memref<16x128xf32, #tpu.memory_space<vmem>>, vector<16x128xf32>
      tpu.vector_store %arg8[%c0_11, %c0_12], %12 {strides = array<i32>} : memref<16x128xf32, #tpu.memory_space<vmem>>, vector<16x128xf32>,
    } else {
    }
    %c0 = arith.constant 0 : index
    %c0_1 = arith.constant 0 : index
    %3 = vector.load %arg8[%c0, %c0_1] : memref<16x128xf32, #tpu.memory_space<vmem>>, vector<16x128xf32>
    %c0_2 = arith.constant 0 : index
    %c0_3 = arith.constant 0 : index
    %4 = vector.load %arg2[%c0_2, %c0_3] : memref<16x32xf32, #tpu.memory_space<vmem>>, vector<16x32xf32>
    %c0_4 = arith.constant 0 : index
    %c0_5 = arith.constant 0 : index
    %5 = vector.load %arg3[%c0_4, %c0_5] : memref<32x128xf32, #tpu.memory_space<vmem>>, vector<32x128xf32>
    %cst = arith.constant dense<0.000000e+00> : vector<16x128xf32>
    %6 = tpu.matmul %4, %5, %cst {dimension_numbers = #tpu.dot_dimension_numbers<[1], [0], [0], [1], [0, 0, 1, 1], [], []>} : vector<16x32xf32>, vector<32x128xf32>, vector<16x128xf32> -> vector<16x128xf32>
    %7 = arith.addf %3, %6 : vector<16x128xf32>
    %c0_6 = arith.constant 0 : index
    %c0_7 = arith.constant 0 : index
    %8 = vector.load %arg8[%c0_6, %c0_7] : memref<16x128xf32, #tpu.memory_space<vmem>>, vector<16x128xf32>
    tpu.vector_store %arg8[%c0_6, %c0_7], %7 {strides = array<i32>} : memref<16x128xf32, #tpu.memory_space<vmem>>, vector<16x128xf32>,
    %c0_i32_8 = arith.constant 0 : i32
    %9 = arith.cmpi eq, %arg1, %c0_i32_8 : i32
    %10 = arith.extui %9 : i1 to i32
    %c0_i32_9 = arith.constant 0 : i32
    %11 = arith.cmpi ne, %10, %c0_i32_9 : i32
    scf.if %11 {
      %c0_10 = arith.constant 0 : index
      %c0_11 = arith.constant 0 : index
      %12 = vector.load %arg8[%c0_10, %c0_11] : memref<16x128xf32, #tpu.memory_space<vmem>>, vector<16x128xf32>
      %c0_12 = arith.constant 0 : index
      %c0_13 = arith.constant 0 : index
      %13 = vector.load %arg4[%c0_12, %c0_13] : memref<1x128xf32, #tpu.memory_space<vmem>>, vector<1x128xf32>
      %14 = vector.broadcast %13 : vector<1x128xf32> to vector<16x128xf32>
      %15 = arith.addf %12, %14 : vector<16x128xf32>
      %cst_14 = arith.constant 0.000000e+00 : f32
      %16 = vector.broadcast %cst_14 : f32 to vector<16x128xf32>
      %17 = arith.maximumf %15, %16 : vector<16x128xf32>
      %c0_15 = arith.constant 0 : index
      %c0_16 = arith.constant 0 : index
      %18 = vector.load %arg5[%c0_15, %c0_16] : memref<128x8xf32, #tpu.memory_space<vmem>>, vector<128x8xf32>
      %cst_17 = arith.constant dense<0.000000e+00> : vector<16x8xf32>
      %19 = tpu.matmul %17, %18, %cst_17 {dimension_numbers = #tpu.dot_dimension_numbers<[1], [0], [0], [1], [0, 0, 1, 1], [], []>} : vector<16x128xf32>, vector<128x8xf32>, vector<16x8xf32> -> vector<16x8xf32>
      %c0_18 = arith.constant 0 : index
      %c0_19 = arith.constant 0 : index
      %20 = vector.load %arg6[%c0_18, %c0_19] : memref<1x8xf32, #tpu.memory_space<vmem>>, vector<1x8xf32>
      %21 = vector.broadcast %20 : vector<1x8xf32> to vector<16x8xf32>
      %22 = arith.addf %19, %21 : vector<16x8xf32>
      %c0_20 = arith.constant 0 : index
      %c0_21 = arith.constant 0 : index
      %23 = vector.load %arg7[%c0_20, %c0_21] : memref<16x8xf32, #tpu.memory_space<vmem>>, vector<16x8xf32>
      tpu.vector_store %arg7[%c0_20, %c0_21], %22 {strides = array<i32>} : memref<16x8xf32, #tpu.memory_space<vmem>>, vector<16x8xf32>,
    } else {
    }
    return
  }
  func.func @transform_0(%arg0: i32, %arg1: i32) -> (i32, i32) {
    %c0_i32 = arith.constant 0 : i32
    return %arg0, %arg1 : i32, i32
  }
  func.func @transform_1(%arg0: i32, %arg1: i32) -> (i32, i32) {
    %c0_i32 = arith.constant 0 : i32
    %c0_i32_0 = arith.constant 0 : i32
    return %arg1, %c0_i32 : i32, i32
  }
  func.func @transform_2(%arg0: i32, %arg1: i32) -> (i32, i32) {
    %c0_i32 = arith.constant 0 : i32
    %c0_i32_0 = arith.constant 0 : i32
    %c0_i32_1 = arith.constant 0 : i32
    return %c0_i32, %c0_i32_0 : i32, i32
  }
  func.func @transform_3(%arg0: i32, %arg1: i32) -> (i32, i32) {
    %c0_i32 = arith.constant 0 : i32
    %c0_i32_0 = arith.constant 0 : i32
    %c0_i32_1 = arith.constant 0 : i32
    return %c0_i32, %c0_i32_0 : i32, i32
  }
  func.func @transform_4(%arg0: i32, %arg1: i32) -> (i32, i32) {
    %c0_i32 = arith.constant 0 : i32
    %c0_i32_0 = arith.constant 0 : i32
    %c0_i32_1 = arith.constant 0 : i32
    return %c0_i32, %c0_i32_0 : i32, i32
  }
  func.func @transform_5(%arg0: i32, %arg1: i32) -> (i32, i32) {
    %c0_i32 = arith.constant 0 : i32
    %c0_i32_0 = arith.constant 0 : i32
    return %arg0, %c0_i32 : i32, i32
  }
}

</mosaic_0001>

<llo_original>
// kernel: tpu_custom_call.1
$region0: #{tpu_custom_call.1}
  #allocation0 [shape = 'u32[]', space=smem, size = 0x4, offset = 0x4, fixed_abs, tag = 'smem constant byte address 0x4 - core index']
  #allocation1 [shape = 'u32[144,128]{1,0:T(1,128)}', space=vmem, size = 0x12000, scoped, tag = 'internal scratch']
  #allocation2 [shape = 'f32[16,128]{1,0:T(8,128)}', space=vmem, size = 0x2000, scoped, tag = 'scratch operand']
  %s0 = inlined_call_operand.vmem [shape: f32[16,32], index: 0, kind: input, shape index: {}]
  %s1 = inlined_call_operand.vmem [shape: f32[32,128], index: 1, kind: input, shape index: {}]
  %s2 = inlined_call_operand.vmem [shape: f32[1,128], index: 2, kind: input, shape index: {}]
  %s3 = inlined_call_operand.vmem [shape: f32[128,8], index: 3, kind: input, shape index: {}]
  %s4 = inlined_call_operand.vmem [shape: f32[1,8], index: 4, kind: input, shape index: {}]
  %s5 = inlined_call_operand.vmem [shape: f32[16,8], index: 5, kind: output, shape index: {}]
  %s6 = sld [smem:[#allocation0]]
  $region38: #{tpu_custom_call.1} parent=0
    _
  %s8 = ssub.s32 1, %s6
  %s9 = scalar_select 0, %s8, %s6
  // Predicated region
  $region2: #{tpu_custom_call.1} parent=0 // pred_check
    _
  $region3: #{tpu_custom_call.1} parent=0 // pred_check_branch
    %11 = sbr.rel (0) target = $region5
  $region4: #{tpu_custom_call.1} parent=0 // pred_region
    _
  $region5: #{tpu_custom_call.1} parent=0 // pred_fallthru
    _
  // Predicated region
  $region6: #{tpu_custom_call.1} parent=0 // pred_check
    _
  $region7: #{tpu_custom_call.1} parent=0 // pred_check_branch
    %13 = sbr.rel (0) target = $region9
  $region8: #{tpu_custom_call.1} parent=0 // pred_region
    _
  $region9: #{tpu_custom_call.1} parent=0 // pred_fallthru
    _
  // Predicated region
  $region10: #{tpu_custom_call.1} parent=0 // pred_check
    _
  $region11: #{tpu_custom_call.1} parent=0 // pred_check_branch
    %15 = sbr.rel (0) target = $region13
  $region12: #{tpu_custom_call.1} parent=0 // pred_region
    _
  $region13: #{tpu_custom_call.1} parent=0 // pred_fallthru
    _
  // Predicated region
  $region14: #{tpu_custom_call.1} parent=0 // pred_check
    _
  $region15: #{tpu_custom_call.1} parent=0 // pred_check_branch
    %17 = sbr.rel (0) target = $region17
  $region16: #{tpu_custom_call.1} parent=0 // pred_region
    _
  $region17: #{tpu_custom_call.1} parent=0 // pred_fallthru
    _
  // Predicated region
  $region18: #{tpu_custom_call.1} parent=0 // pred_check
    _
  $region19: #{tpu_custom_call.1} parent=0 // pred_check_branch
    %19 = sbr.rel (0) target = $region21
  $region20: #{tpu_custom_call.1} parent=0 // pred_region
    _
  $region21: #{tpu_custom_call.1} parent=0 // pred_fallthru
    _
  %p20 = scmp.eq.s32.totalorder 0, 0
  // Predicated region
  $region22: #{tpu_custom_call.1} parent=0 // pred_check
    %p21 = pneg %p20
  $region23: #{tpu_custom_call.1} parent=0 // pred_check_branch
    %23 = sbr.rel (%p21) target = $region25
  $region24: #{tpu_custom_call.1} parent=0 // pred_region
    %24 = vst [vmem:[#allocation2] sm:$0xff] 0.0
    %25 = vst [vmem:[#allocation2 + $0x8] sm:$0xff] 0.0
  $region25: #{tpu_custom_call.1} parent=0 // pred_fallthru
    _
  %v26 = vld [vmem:[#allocation2] sm:$0xff]
  %v27 = vld [vmem:[#allocation2 + $0x8] sm:$0xff]
  %v28 = vld [vmem:[%s0] sm:$0xff]
  %v29 = vld [vmem:[%s0 + $0x8] sm:$0xff]
  %v30 = vld [vmem:[%s1] sm:$0xff]
  %v31 = vld [vmem:[%s1 + $0x8] sm:$0xff]
  %v32 = vld [vmem:[%s1 + $0x10] sm:$0xff]
  %v33 = vld [vmem:[%s1 + $0x18] sm:$0xff]
  %vm34 = vcmask 261120
  %v36 = vsel %vm34, %v28, 0
  %v39 = vsel %vm34, %v29, 0
  %41 = vmatprep.subr.mxu0 0.0
  %42 = vmatpush1.msra.mxu0 0.0
  %43 = vmatprep.subr.mxu0 0.0
  %44 = vmatpush1.msra.mxu0 0.0
  %45 = vmatprep.subr.mxu0 0.0
  %46 = vmatpush1.msra.mxu0 0.0
  %47 = vmatprep.subr.mxu0 0.0
  %48 = vmatpush1.msra.mxu0 0.0
  %49 = vmatprep.subr.mxu0 0.0
  %50 = vmatpush1.msra.mxu0 0.0
  %51 = vmatprep.subr.mxu0 0.0
  %52 = vmatpush1.msra.mxu0 0.0
  %53 = vmatprep.subr.mxu0 0.0
  %54 = vmatpush1.msra.mxu0 0.0
  %55 = vmatprep.subr.mxu0 0.0
  %56 = vmatpush1.msra.mxu0 0.0
  %57 = vmatprep.subr.mxu0 0.0
  %58 = vmatpush1.msra.mxu0 0.0
  %59 = vmatprep.subr.mxu0 0.0
  %60 = vmatpush1.msra.mxu0 0.0
  %61 = vmatprep.subr.mxu0 0.0
  %62 = vmatpush1.msra.mxu0 0.0
  %63 = vmatprep.subr.mxu0 0.0
  %64 = vmatpush1.msra.mxu0 0.0
  %65 = vmatprep.subr.mxu0 0.0
  %66 = vmatpush1.msra.mxu0 %v33
  %67 = vmatprep.subr.mxu0 0.0
  %68 = vmatpush1.msra.mxu0 %v32
  %69 = vmatprep.subr.mxu0 0.0
  %70 = vmatpush1.msra.mxu0 %v31
  %71 = vmatprep.subr.mxu0 0.0
  %72 = vmatpush1.msra.mxu0 %v30
  %73 = vmatprep.subr.mxu0 0.0
  %74 = vmatpush2.msra.mxu0 0.0
  %75 = vmatprep.subr.mxu0 0.0
  %76 = vmatpush2.msra.mxu0 0.0
  %77 = vmatprep.subr.mxu0 0.0
  %78 = vmatpush2.msra.mxu0 0.0
  %79 = vmatprep.subr.mxu0 0.0
  %80 = vmatpush2.msra.mxu0 0.0
  %81 = vmatprep.subr.mxu0 0.0
  %82 = vmatpush2.msra.mxu0 0.0
  %83 = vmatprep.subr.mxu0 0.0
  %84 = vmatpush2.msra.mxu0 0.0
  %85 = vmatprep.subr.mxu0 0.0
  %86 = vmatpush2.msra.mxu0 0.0
  %87 = vmatprep.subr.mxu0 0.0
  %88 = vmatpush2.msra.mxu0 0.0
  %89 = vmatprep.subr.mxu0 0.0
  %90 = vmatpush2.msra.mxu0 0.0
  %91 = vmatprep.subr.mxu0 0.0
  %92 = vmatpush2.msra.mxu0 0.0
  %93 = vmatprep.subr.mxu0 0.0
  %94 = vmatpush2.msra.mxu0 0.0
  %95 = vmatprep.subr.mxu0 0.0
  %96 = vmatpush2.msra.mxu0 0.0
  %97 = vmatprep.subr.mxu0 0.0
  %98 = vmatpush2.msra.mxu0 0.0
  %99 = vmatprep.subr.mxu0 0.0
  %100 = vmatpush2.msra.mxu0 0.0
  %101 = vmatprep.subr.mxu0 0.0
  %102 = vmatpush2.msra.mxu0 0.0
  %103 = vmatprep.subr.mxu0 0.0
  %104 = vmatpush2.msra.mxu0 0.0
  %105 = vmatprep.mubr.f32.mxu0 0.0
  %106 = vmatmul.mubr.f32.gmra.mxu0 %v36
  %v107 = vpop.f32.mrf.mxu0
  %v108 = vadd.f32 0.0, %v107
  %v109 = vpop.f32.mrf.mxu0
  %110 = vmatprep.mubr.f32.mxu0 0.0
  %111 = vmatmul.mubr.f32.gmra.mxu0 %v39
  %v112 = vpop.f32.mrf.mxu0
  %v113 = vadd.f32 0.0, %v112
  %v114 = vpop.f32.mrf.mxu0
  %115 = vdwg.mxu0
  %v116 = vadd.f32 %v26, %v108
  %v117 = vadd.f32 %v27, %v113
  %118 = vst [vmem:[#allocation2] sm:$0xff] %v116
  %119 = vst [vmem:[#allocation2 + $0x8] sm:$0xff] %v117
  // Predicated region
  $region26: #{tpu_custom_call.1} parent=0 // pred_check
    %p120 = pneg %p20
  $region27: #{tpu_custom_call.1} parent=0 // pred_check_branch
    %122 = sbr.rel (%p120) target = $region29
  $region28: #{tpu_custom_call.1} parent=0 // pred_region
    %v123 = vld [vmem:[#allocation2] sm:$0xff]
    %v124 = vld [vmem:[#allocation2 + $0x8] sm:$0xff]
    %v125 = vld [vmem:[%s2] sm:$0x1]
    %v127 = vlaneseq
    %v128 = vshrl.u32 %v127, 7
    %v129 = vsub.s32 0, %v128
    %v130 = vrot.slane %v125, %v129
    %v132 = vadd.f32 %v123, %v130
    %v133 = vadd.f32 %v124, %v130
    %v134 = vmax.f32 %v132, 0.0
    %v135 = vmax.f32 %v133, 0.0
    %v136 = vld [vmem:[%s3] sm:$0xff]
    %v137 = vld [vmem:[%s3 + $0x8] sm:$0xff]
    %v138 = vld [vmem:[%s3 + $0x10] sm:$0xff]
    %v139 = vld [vmem:[%s3 + $0x18] sm:$0xff]
    %v140 = vld [vmem:[%s3 + $0x20] sm:$0xff]
    %v141 = vld [vmem:[%s3 + $0x28] sm:$0xff]
    %v142 = vld [vmem:[%s3 + $0x30] sm:$0xff]
    %v143 = vld [vmem:[%s3 + $0x38] sm:$0xff]
    %v144 = vld [vmem:[%s3 + $0x40] sm:$0xff]
    %v145 = vld [vmem:[%s3 + $0x48] sm:$0xff]
    %v146 = vld [vmem:[%s3 + $0x50] sm:$0xff]
    %v147 = vld [vmem:[%s3 + $0x58] sm:$0xff]
    %v148 = vld [vmem:[%s3 + $0x60] sm:$0xff]
    %v149 = vld [vmem:[%s3 + $0x68] sm:$0xff]
    %v150 = vld [vmem:[%s3 + $0x70] sm:$0xff]
    %v151 = vld [vmem:[%s3 + $0x78] sm:$0xff]
    %v152 = vld [vmem:[%s4] sm:$0x1]
    %v154 = vlaneseq
    %v155 = vshrl.u32 %v154, 7
    %v156 = vsub.s32 0, %v155
    %v157 = vrot.slane %v152, %v156
    %159 = vmatprep.subr.mxu0 0.0
    %160 = vmatpush1.msra.mxu0 %v151
    %161 = vmatprep.subr.mxu0 0.0
    %162 = vmatpush1.msra.mxu0 %v150
    %163 = vmatprep.subr.mxu0 0.0
    %164 = vmatpush1.msra.mxu0 %v149
    %165 = vmatprep.subr.mxu0 0.0
    %166 = vmatpush1.msra.mxu0 %v148
    %167 = vmatprep.subr.mxu0 0.0
    %168 = vmatpush1.msra.mxu0 %v147
    %169 = vmatprep.subr.mxu0 0.0
    %170 = vmatpush1.msra.mxu0 %v146
    %171 = vmatprep.subr.mxu0 0.0
    %172 = vmatpush1.msra.mxu0 %v145
    %173 = vmatprep.subr.mxu0 0.0
    %174 = vmatpush1.msra.mxu0 %v144
    %175 = vmatprep.subr.mxu0 0.0
    %176 = vmatpush1.msra.mxu0 %v143
    %177 = vmatprep.subr.mxu0 0.0
    %178 = vmatpush1.msra.mxu0 %v142
    %179 = vmatprep.subr.mxu0 0.0
    %180 = vmatpush1.msra.mxu0 %v141
    %181 = vmatprep.subr.mxu0 0.0
    %182 = vmatpush1.msra.mxu0 %v140
    %183 = vmatprep.subr.mxu0 0.0
    %184 = vmatpush1.msra.mxu0 %v139
    %185 = vmatprep.subr.mxu0 0.0
    %186 = vmatpush1.msra.mxu0 %v138
    %187 = vmatprep.subr.mxu0 0.0
    %188 = vmatpush1.msra.mxu0 %v137
    %189 = vmatprep.subr.mxu0 0.0
    %190 = vmatpush1.msra.mxu0 %v136
    %191 = vmatprep.subr.mxu0 0.0
    %192 = vmatpush2.msra.mxu0 0.0
    %193 = vmatprep.subr.mxu0 0.0
    %194 = vmatpush2.msra.mxu0 0.0
    %195 = vmatprep.subr.mxu0 0.0
    %196 = vmatpush2.msra.mxu0 0.0
    %197 = vmatprep.subr.mxu0 0.0
    %198 = vmatpush2.msra.mxu0 0.0
    %199 = vmatprep.subr.mxu0 0.0
    %200 = vmatpush2.msra.mxu0 0.0
    %201 = vmatprep.subr.mxu0 0.0
    %202 = vmatpush2.msra.mxu0 0.0
    %203 = vmatprep.subr.mxu0 0.0
    %204 = vmatpush2.msra.mxu0 0.0
    %205 = vmatprep.subr.mxu0 0.0
    %206 = vmatpush2.msra.mxu0 0.0
    %207 = vmatprep.subr.mxu0 0.0
    %208 = vmatpush2.msra.mxu0 0.0
    %209 = vmatprep.subr.mxu0 0.0
    %210 = vmatpush2.msra.mxu0 0.0
    %211 = vmatprep.subr.mxu0 0.0
    %212 = vmatpush2.msra.mxu0 0.0
    %213 = vmatprep.subr.mxu0 0.0
    %214 = vmatpush2.msra.mxu0 0.0
    %215 = vmatprep.subr.mxu0 0.0
    %216 = vmatpush2.msra.mxu0 0.0
    %217 = vmatprep.subr.mxu0 0.0
    %218 = vmatpush2.msra.mxu0 0.0
    %219 = vmatprep.subr.mxu0 0.0
    %220 = vmatpush2.msra.mxu0 0.0
    %221 = vmatprep.subr.mxu0 0.0
    %222 = vmatpush2.msra.mxu0 0.0
    %223 = vmatprep.mubr.f32.mxu0 0.0
    %224 = vmatmul.mubr.f32.gmra.mxu0 %v134
    %v225 = vpop.f32.mrf.mxu0
    %v226 = vadd.f32 %v157, %v225
    %v227 = vpop.f32.mrf.mxu0
    %228 = vmatprep.mubr.f32.mxu0 0.0
    %229 = vmatmul.mubr.f32.gmra.mxu0 %v135
    %v230 = vpop.f32.mrf.mxu0
    %v231 = vadd.f32 %v157, %v230
    %v232 = vpop.f32.mrf.mxu0
    %233 = vdwg.mxu0
    %vm234 = vcmask 64512
    %235 = vst.msk [vmem:[%s5] sm:$0xff] %vm234, %v226
    %236 = vst.msk [vmem:[%s5 + $0x8] sm:$0xff] %vm234, %v231
  $region29: #{tpu_custom_call.1} parent=0 // pred_fallthru
    _
  // Predicated region
  $region30: #{tpu_custom_call.1} parent=0 // pred_check
    _
  $region31: #{tpu_custom_call.1} parent=0 // pred_check_branch
    %238 = sbr.rel (0) target = $region33
  $region32: #{tpu_custom_call.1} parent=0 // pred_region
    _
  $region33: #{tpu_custom_call.1} parent=0 // pred_fallthru
    _
  // Predicated region
  $region34: #{tpu_custom_call.1} parent=0 // pred_check
    _
  $region35: #{tpu_custom_call.1} parent=0 // pred_check_branch
    %240 = sbr.rel (0) target = $region37
  $region36: #{tpu_custom_call.1} parent=0 // pred_region
    _
  $region37: #{tpu_custom_call.1} parent=0 // pred_fallthru
    _

</llo_original>
